<compile_context>
chip_gen: v5e
topology: v5e:2x2
jax: 0.10.0
libtpu: 0.0.40
codegen_flags: <defaults>
</compile_context>

<pallas_src>
import jax
import jax.numpy as jnp
from jax import lax
from jax.experimental import pallas as pl
from jax.experimental.pallas import tpu as pltpu

EPS = 1e-5   # LayerNorm eps (actionformer LayerNorm default)
PAD = 8      # sublane-aligned offset of the time-major slab inside the staging scratch


# ----------------------------------------------------------------------------- kernel


def _downsample_kernel(x_ref, xp_ref, m_ref, w_ref, b_ref, g_ref, beta_ref,
                       o_ref, xt_ref):
    # x_ref:    (C, 2*TILE_T)       NCT input slab for this (batch, time-tile)
    # xp_ref:   (1, C)              halo column x[:, 2*j*TILE_T - 1] (zeros for j == 0)
    # m_ref:    (TILE_T, 1)         nearest-downsampled {0,1} mask (float32)
    # w_ref:    (3, C, C)           conv taps, w_ref[k] = torch_weight[:, :, k].T  (MXU dtype)
    # b_ref:    (1, C)              conv bias   (f32)
    # g_ref:    (1, C)              LN gamma    (f32)
    # beta_ref: (1, C)              LN beta     (f32)
    # o_ref:    (C, TILE_T)         output slab (NCT, input dtype)
    # xt_ref:   (2*TILE_T+PAD, C)   f32 scratch: time-major copy of [halo | slab]
    tile_t = o_ref.shape[1]
    mxu_dt = w_ref.dtype           # bf16 (default) or f32 (strict-parity path)

    # Stage the slab time-major (rows = time) so all further slicing is on sublanes.
    xt_ref[pl.ds(PAD - 1, 1), :] = xp_ref[...].astype(xt_ref.dtype)
    xt_ref[pl.ds(PAD, 2 * tile_t), :] = jnp.transpose(x_ref[...]).astype(xt_ref.dtype)

    # Conv1d(kernel=3, stride=2, padding=1):
    #   y[t] = x[2t-1] @ W0 + x[2t] @ W1 + x[2t+1] @ W2 + b
    x_prev = xt_ref[pl.ds(PAD - 1, tile_t, stride=2), :].astype(mxu_dt)   # x[2t-1] (row PAD-1 = halo)
    x_even = xt_ref[pl.ds(PAD, tile_t, stride=2), :].astype(mxu_dt)       # x[2t]
    x_odd = xt_ref[pl.ds(PAD + 1, tile_t, stride=2), :].astype(mxu_dt)    # x[2t+1]
    # TODO(synk): restructure to a (TILE_T, 2C) scratch + fused K=2C dot to drop two of the
    #             three stride-2 reads (only legal/beneficial when C % 128 == 0).

    acc = jnp.dot(x_prev, w_ref[0], preferred_element_type=jnp.float32)
    acc = acc + jnp.dot(x_even, w_ref[1], preferred_element_type=jnp.float32)
    acc = acc + jnp.dot(x_odd, w_ref[2], preferred_element_type=jnp.float32)
    acc = acc + b_ref[...]

    # MaskedConv1D: zero out padded (invalid) time steps before the LayerNorm.
    acc = acc * m_ref[...]

    # LayerNorm over channels (biased variance, matches torch.mean(res**2)) + affine, in f32.
    mu = jnp.mean(acc, axis=-1, keepdims=True)
    r = acc - mu
    sigma = jnp.mean(r * r, axis=-1, keepdims=True)
    y = r * lax.rsqrt(sigma + EPS)
    y = y * g_ref[...] + beta_ref[...]

    # SiLU
    y = y * jax.nn.sigmoid(y)

    # Back to NCT orientation; TILE_T is the lane axis -> lane-dense stores.
    o_ref[...] = jnp.transpose(y).astype(o_ref.dtype)


# ----------------------------------------------------------------------------- sizing


def _pad8x128(rows, cols, itemsize):
    return (-(-rows // 8) * 8) * (-(-cols // 128) * 128) * itemsize


def _vmem_footprint(c, tile_t, x_itemsize, w_itemsize):
    """Per-step VMEM: double-buffered streaming blocks + single-buffered constants + scratch."""
    streamed = (_pad8x128(c, 2 * tile_t, x_itemsize)      # x slab
                + _pad8x128(1, c, x_itemsize)             # halo column
                + _pad8x128(tile_t, 1, 4)                 # mask (f32)
                + _pad8x128(c, tile_t, x_itemsize))       # output slab
    constants = 3 * _pad8x128(c, c, w_itemsize) + 3 * _pad8x128(1, c, 4)
    scratch = _pad8x128(2 * tile_t + PAD, c, 4)           # f32 staging scratch
    return 2 * streamed + constants + scratch


def _vmem_capacity_bytes():
    try:
        return int(pltpu.get_tpu_info().vmem_capacity_bytes)
    except Exception:
        return 64 * 1024 * 1024   # conservative fallback (v7x per-TensorCore VMEM)


def _choose_tile_t(t_out, batch, footprint_fn, vmem_budget):
    if t_out <= 128:
        return t_out                        # single full-length tile; block == full array dim
    cands = [c for c in (1024, 512, 256, 128)
             if c <= t_out and footprint_fn(c) <= vmem_budget]
    if not cands:
        return 128                          # smallest legal tile; vmem limit gets stretched
    for c in cands:                         # prefer exact tiling with enough steps to pipeline
        if t_out % c == 0 and batch * (t_out // c) >= 4:
            return c
    for c in cands:                         # then allow a padded tail
        if batch * pl.cdiv(t_out, c) >= 4:
            return c
    return cands[-1]                        # short sequences: smallest fitting tile (more steps)


def _const_spec(block_shape, index_map):
    """Grid-invariant operand: single-buffer it (saves VMEM); fall back if unsupported."""
    try:
        return pl.BlockSpec(block_shape, index_map, pipeline_mode=pl.Buffered(1))
    except Exception:
        return pl.BlockSpec(block_shape, index_map)


# ----------------------------------------------------------------------------- wrapper


def downsample_forward(x_nct, mask_b1t, conv_w, conv_b, ln_w, ln_b,
                       scale_factor=2, mxu_bf16=True):
    """x_nct: (B, C, T); mask_b1t: (B, 1, T) bool.
    Returns ((B, C, T//2) in x's dtype, (B, 1, T//2) bool), matching PyTorch `downsample.forward`.
    Pass bf16 x for bf16 HBM streams (LN/SiLU math stays f32 inside the kernel)."""
    # TODO(synk): only the scale_factor == 2 config (kernel=3, stride=2, pad=1) instantiated by
    #             `downsample` is implemented; scale_factor == 1 / > 2 variants are not.
    assert scale_factor == 2
    B, C, T = x_nct.shape
    assert T % scale_factor == 0
    T_out = T // scale_factor

    x_isz = jnp.dtype(x_nct.dtype).itemsize
    mxu_dtype = jnp.bfloat16 if mxu_bf16 else jnp.float32
    w_isz = jnp.dtype(mxu_dtype).itemsize

    cap = _vmem_capacity_bytes()
    budget = max(cap - 16 * 1024 * 1024, 16 * 1024 * 1024)
    tile_t = _choose_tile_t(T_out, B,
                            lambda t: _vmem_footprint(C, t, x_isz, w_isz), budget)
    n_tiles = pl.cdiv(T_out, tile_t)
    t_out_pad = n_tiles * tile_t
    t_pad = scale_factor * t_out_pad

    # mask downsample: F.interpolate(mask.float(), size=T//2, mode='nearest') == mask[..., ::2]
    mask_ds = mask_b1t[:, :, ::scale_factor]                        # (B, 1, T_out) bool, returned

    x_in, mask_in = x_nct, mask_b1t
    if t_pad != T:   # ragged tail: zero-pad up to a whole tile; padded outputs are sliced off below
        x_in = jnp.pad(x_nct, ((0, 0), (0, 0), (0, t_pad - T)))
        mask_in = jnp.pad(mask_b1t, ((0, 0), (0, 0), (0, t_pad - T)))

    # Small parameter / side-tensor re-layouts (negligible traffic).
    w_k = jnp.transpose(conv_w, (2, 1, 0)).astype(mxu_dtype)        # (K, C_in, C_out)
    b_2d = conv_b.reshape(1, C).astype(jnp.float32)
    g_2d = ln_w.reshape(1, C).astype(jnp.float32)
    beta_2d = ln_b.reshape(1, C).astype(jnp.float32)
    mask_f = jnp.transpose(mask_in[:, :, ::scale_factor], (0, 2, 1)).astype(jnp.float32)

    # Per-tile halo column x[:, 2*j*tile_t - 1] (zero for the first tile): (B, n_tiles, 1, C).
    halo_src = x_in[:, :, 2 * tile_t - 1: t_pad - 1: 2 * tile_t]    # (B, C, n_tiles - 1)
    halo = jnp.concatenate([jnp.zeros((B, C, 1), x_in.dtype), halo_src], axis=2)
    halo = jnp.transpose(halo, (0, 2, 1)).reshape(B, n_tiles, 1, C)

    need = _vmem_footprint(C, tile_t, x_isz, w_isz)
    vmem_limit = int(min(max(int(need * 1.25) + (4 << 20), 32 << 20), cap - (8 << 20)))

    out_pad = pl.pallas_call(
        _downsample_kernel,
        out_shape=jax.ShapeDtypeStruct((B, C, t_out_pad), x_in.dtype),
        grid_spec=pltpu.PrefetchScalarGridSpec(
            num_scalar_prefetch=0,
            grid=(B, n_tiles),
            in_specs=[
                pl.BlockSpec((None, C, 2 * tile_t), lambda b, j: (b, 0, j)),   # x (NCT slab)
                pl.BlockSpec((None, None, 1, C), lambda b, j: (b, j, 0, 0)),   # halo column
                pl.BlockSpec((None, tile_t, 1), lambda b, j: (b, j, 0)),       # mask (float)
                _const_spec((3, C, C), lambda b, j: (0, 0, 0)),                # conv weight
                _const_spec((1, C), lambda b, j: (0, 0)),                      # conv bias
                _const_spec((1, C), lambda b, j: (0, 0)),                      # LN gamma
                _const_spec((1, C), lambda b, j: (0, 0)),                      # LN beta
            ],
            out_specs=pl.BlockSpec((None, C, tile_t), lambda b, j: (b, 0, j)),
            scratch_shapes=[pltpu.VMEM((2 * tile_t + PAD, C), jnp.float32)],
        ),
        compiler_params=pltpu.CompilerParams(
            dimension_semantics=("parallel", "parallel"),
            vmem_limit_bytes=vmem_limit,
        ),
    )(x_in, halo, mask_f, w_k, b_2d, g_2d, beta_2d)

    out = out_pad if t_out_pad == T_out else out_pad[:, :, :T_out]
    return out, mask_ds


# ----------------------------------------------------------------------------- reference / tests


def downsample_reference(x_nct, mask_b1t, conv_w, conv_b, ln_w, ln_b, scale_factor=2):
    """Pure-JAX f32 reference mirroring the PyTorch forward exactly."""
    dn = lax.conv_dimension_numbers(x_nct.shape, conv_w.shape, ("NCH", "OIH", "NCH"))
    y = lax.conv_general_dilated(x_nct, conv_w, window_strides=(scale_factor,),
                                 padding=[(1, 1)], dimension_numbers=dn)
    y = y + conv_b.reshape(1, -1, 1)
    mask_ds = mask_b1t[:, :, ::scale_factor]
    y = y * mask_ds.astype(y.dtype)
    mu = jnp.mean(y, axis=1, keepdims=True)
    r = y - mu
    sigma = jnp.mean(r * r, axis=1, keepdims=True)
    y = r / jnp.sqrt(sigma + EPS)
    y = y * ln_w.reshape(1, -1, 1) + ln_b.reshape(1, -1, 1)
    y = y * jax.nn.sigmoid(y)
    return y, mask_ds


def _run_case(key, B, C, T, lengths, x_dtype=jnp.float32, mxu_bf16=True,
              atol=2e-4, rtol=2e-4):
    k1, k2, k3, k4, k5 = jax.random.split(key, 5)
    x = jax.random.normal(k1, (B, C, T), dtype=jnp.float32)
    lens = jnp.asarray(lengths, dtype=jnp.int32)
    mask = jnp.arange(T)[None, None, :] < lens[:, None, None]         # (B, 1, T) bool

    conv_w = 0.05 * jax.random.normal(k2, (C, C, 3), dtype=jnp.float32)
    conv_b = 0.1 * jax.random.normal(k3, (C,), dtype=jnp.float32)
    ln_w = 1.0 + 0.1 * jax.random.normal(k4, (C,), dtype=jnp.float32)
    ln_b = 0.1 * jax.random.normal(k5, (C,), dtype=jnp.float32)

    out, out_mask = downsample_forward(x.astype(x_dtype), mask, conv_w, conv_b, ln_w, ln_b,
                                       mxu_bf16=mxu_bf16)
    out = jax.block_until_ready(out)

    ref, ref_mask = downsample_reference(x, mask, conv_w, conv_b, ln_w, ln_b)
    assert out.shape == (B, C, T // 2) and out_mask.shape == (B, 1, T // 2)
    assert out.dtype == x_dtype and out_mask.dtype == jnp.bool_
    assert bool(jnp.array_equal(out_mask, ref_mask))
    err = float(jnp.max(jnp.abs(out.astype(jnp.float32) - ref)))
    assert bool(jnp.allclose(out.astype(jnp.float32), ref, atol=atol, rtol=rtol)), \
        f"max abs err {err}"


if __name__ == "__main__":
    key = jax.random.PRNGKey(0)
    k1, k2, k3, k4 = jax.random.split(key, 4)
    # 1) strict f32 parity path, small single-tile case (n_embd=32, T=16)
    _run_case(k1, B=2, C=32, T=16, lengths=(16, 10), mxu_bf16=False, atol=2e-4, rtol=2e-4)
    # 2) strict f32 parity, ragged T_out (320 -> 3 tiles of 128 + padded tail) and B=1
    _run_case(k2, B=1, C=32, T=640, lengths=(600,), mxu_bf16=False, atol=2e-4, rtol=2e-4)
    # 3) default path: bf16 MXU operands, f32 HBM streams, multi-tile halo + mask boundary
    _run_case(k3, B=2, C=32, T=512, lengths=(512, 300), mxu_bf16=True, atol=1e-1, rtol=5e-2)
    # 4) bf16 HBM streams (v6e bandwidth / v7x VMEM win): bf16 in, bf16 out, f32 LN math inside
    _run_case(k4, B=2, C=32, T=512, lengths=(512, 300), x_dtype=jnp.bfloat16, mxu_bf16=True,
              atol=2e-1, rtol=1e-1)
    print("KERNEL_OK")
</pallas_src>

<mosaic_0001>
module attributes {stable_mosaic.version = 11 : i64} {
  func.func @_downsample_kernel(%arg0: i32, %arg1: i32, %arg2: memref<1x32x16xf32, #tpu.memory_space<vmem>>, %arg3: memref<1x1x1x32xf32, #tpu.memory_space<vmem>>, %arg4: memref<1x8x1xf32, #tpu.memory_space<vmem>>, %arg5: memref<3x32x32xf32, #tpu.memory_space<vmem>>, %arg6: memref<1x32xf32, #tpu.memory_space<vmem>>, %arg7: memref<1x32xf32, #tpu.memory_space<vmem>>, %arg8: memref<1x32xf32, #tpu.memory_space<vmem>>, %arg9: memref<1x32x8xf32, #tpu.memory_space<vmem>>, %arg10: memref<24x32xf32, #tpu.memory_space<vmem>>) attributes {dimension_semantics = [#tpu.dimension_semantics<parallel>, #tpu.dimension_semantics<parallel>], iteration_bounds = array<i64: 2, 1>, scalar_prefetch = 0 : i64, scratch_operands = 1 : i64, tpu.core_type = #tpu.core_type<tc>, window_params = [{transform_indices = @transform_0, window_bounds = array<i64: 1, 32, 16>}, {transform_indices = @transform_1, window_bounds = array<i64: 1, 1, 1, 32>}, {transform_indices = @transform_2, window_bounds = array<i64: 1, 8, 1>}, {pipeline_mode = #tpu.pipeline_mode<synchronous>, transform_indices = @transform_3, window_bounds = array<i64: 3, 32, 32>}, {pipeline_mode = #tpu.pipeline_mode<synchronous>, transform_indices = @transform_4, window_bounds = array<i64: 1, 32>}, {pipeline_mode = #tpu.pipeline_mode<synchronous>, transform_indices = @transform_5, window_bounds = array<i64: 1, 32>}, {pipeline_mode = #tpu.pipeline_mode<synchronous>, transform_indices = @transform_6, window_bounds = array<i64: 1, 32>}, {transform_indices = @transform_7, window_bounds = array<i64: 1, 32, 8>}]} {
    %c0 = arith.constant 0 : index
    %c0_0 = arith.constant 0 : index
    %c0_1 = arith.constant 0 : index
    %c0_2 = arith.constant 0 : index
    %0 = vector.load %arg3[%c0, %c0_0, %c0_1, %c0_2] : memref<1x1x1x32xf32, #tpu.memory_space<vmem>>, vector<1x1x1x32xf32>
    %1 = vector.shape_cast %0 : vector<1x1x1x32xf32> to vector<1x32xf32>
    %c7 = arith.constant 7 : index
    %c0_3 = arith.constant 0 : index
    %2 = vector.load %arg10[%c7, %c0_3] : memref<24x32xf32, #tpu.memory_space<vmem>>, vector<1x32xf32>
    tpu.vector_store %arg10[%c7, %c0_3], %1 {strides = array<i32>} : memref<24x32xf32, #tpu.memory_space<vmem>>, vector<1x32xf32>,
    %c0_4 = arith.constant 0 : index
    %c0_5 = arith.constant 0 : index
    %c0_6 = arith.constant 0 : index
    %3 = vector.load %arg2[%c0_4, %c0_5, %c0_6] : memref<1x32x16xf32, #tpu.memory_space<vmem>>, vector<1x32x16xf32>
    %4 = vector.shape_cast %3 : vector<1x32x16xf32> to vector<32x16xf32>
    %5 = tpu.transpose %4, [1, 0] : vector<32x16xf32> -> vector<16x32xf32>
    %c8 = arith.constant 8 : index
    %c0_7 = arith.constant 0 : index
    %6 = vector.load %arg10[%c8, %c0_7] : memref<24x32xf32, #tpu.memory_space<vmem>>, vector<16x32xf32>
    tpu.vector_store %arg10[%c8, %c0_7], %5 {strides = array<i32>} : memref<24x32xf32, #tpu.memory_space<vmem>>, vector<16x32xf32>,
    %c7_8 = arith.constant 7 : index
    %c0_9 = arith.constant 0 : index
    %7 = tpu.strided_load %arg10[%c7_8, %c0_9] {strides = array<i32: 2, 1>} : memref<24x32xf32, #tpu.memory_space<vmem>>, vector<8x32xf32>
    %c8_10 = arith.constant 8 : index
    %c0_11 = arith.constant 0 : index
    %8 = tpu.strided_load %arg10[%c8_10, %c0_11] {strides = array<i32: 2, 1>} : memref<24x32xf32, #tpu.memory_space<vmem>>, vector<8x32xf32>
    %c9 = arith.constant 9 : index
    %c0_12 = arith.constant 0 : index
    %9 = tpu.strided_load %arg10[%c9, %c0_12] {strides = array<i32: 2, 1>} : memref<24x32xf32, #tpu.memory_space<vmem>>, vector<8x32xf32>
    %c0_13 = arith.constant 0 : index
    %c0_14 = arith.constant 0 : index
    %c0_15 = arith.constant 0 : index
    %10 = vector.load %arg5[%c0_13, %c0_14, %c0_15] : memref<3x32x32xf32, #tpu.memory_space<vmem>>, vector<1x32x32xf32>
    %11 = vector.shape_cast %10 : vector<1x32x32xf32> to vector<32x32xf32>
    %cst = arith.constant dense<0.000000e+00> : vector<8x32xf32>
    %12 = tpu.matmul %7, %11, %cst {dimension_numbers = #tpu.dot_dimension_numbers<[1], [0], [0], [1], [0, 0, 1, 1], [], []>} : vector<8x32xf32>, vector<32x32xf32>, vector<8x32xf32> -> vector<8x32xf32>
    %c1 = arith.constant 1 : index
    %c0_16 = arith.constant 0 : index
    %c0_17 = arith.constant 0 : index
    %13 = vector.load %arg5[%c1, %c0_16, %c0_17] : memref<3x32x32xf32, #tpu.memory_space<vmem>>, vector<1x32x32xf32>
    %14 = vector.shape_cast %13 : vector<1x32x32xf32> to vector<32x32xf32>
    %cst_18 = arith.constant dense<0.000000e+00> : vector<8x32xf32>
    %15 = tpu.matmul %8, %14, %cst_18 {dimension_numbers = #tpu.dot_dimension_numbers<[1], [0], [0], [1], [0, 0, 1, 1], [], []>} : vector<8x32xf32>, vector<32x32xf32>, vector<8x32xf32> -> vector<8x32xf32>
    %16 = arith.addf %12, %15 : vector<8x32xf32>
    %c2 = arith.constant 2 : index
    %c0_19 = arith.constant 0 : index
    %c0_20 = arith.constant 0 : index
    %17 = vector.load %arg5[%c2, %c0_19, %c0_20] : memref<3x32x32xf32, #tpu.memory_space<vmem>>, vector<1x32x32xf32>
    %18 = vector.shape_cast %17 : vector<1x32x32xf32> to vector<32x32xf32>
    %cst_21 = arith.constant dense<0.000000e+00> : vector<8x32xf32>
    %19 = tpu.matmul %9, %18, %cst_21 {dimension_numbers = #tpu.dot_dimension_numbers<[1], [0], [0], [1], [0, 0, 1, 1], [], []>} : vector<8x32xf32>, vector<32x32xf32>, vector<8x32xf32> -> vector<8x32xf32>
    %20 = arith.addf %16, %19 : vector<8x32xf32>
    %c0_22 = arith.constant 0 : index
    %c0_23 = arith.constant 0 : index
    %21 = vector.load %arg6[%c0_22, %c0_23] : memref<1x32xf32, #tpu.memory_space<vmem>>, vector<1x32xf32>
    %22 = vector.broadcast %21 : vector<1x32xf32> to vector<8x32xf32>
    %23 = arith.addf %20, %22 : vector<8x32xf32>
    %c0_24 = arith.constant 0 : index
    %c0_25 = arith.constant 0 : index
    %c0_26 = arith.constant 0 : index
    %24 = vector.load %arg4[%c0_24, %c0_25, %c0_26] : memref<1x8x1xf32, #tpu.memory_space<vmem>>, vector<1x8x1xf32>
    %25 = vector.shape_cast %24 : vector<1x8x1xf32> to vector<8x1xf32>
    %26 = vector.broadcast %25 : vector<8x1xf32> to vector<8x32xf32>
    %27 = arith.mulf %23, %26 : vector<8x32xf32>
    %cst_27 = arith.constant dense<0.000000e+00> : vector<8xf32>
    %28 = vector.multi_reduction <add>, %27, %cst_27 [1] : vector<8x32xf32> to vector<8xf32>
    %29 = vector.shape_cast %28 : vector<8xf32> to vector<8x1xf32>
    %cst_28 = arith.constant 3.200000e+01 : f32
    %30 = vector.broadcast %cst_28 : f32 to vector<8x1xf32>
    %31 = arith.divf %29, %30 : vector<8x1xf32>
    %32 = vector.broadcast %31 : vector<8x1xf32> to vector<8x32xf32>
    %33 = arith.subf %27, %32 : vector<8x32xf32>
    %34 = arith.mulf %33, %33 : vector<8x32xf32>
    %cst_29 = arith.constant dense<0.000000e+00> : vector<8xf32>
    %35 = vector.multi_reduction <add>, %34, %cst_29 [1] : vector<8x32xf32> to vector<8xf32>
    %36 = vector.shape_cast %35 : vector<8xf32> to vector<8x1xf32>
    %cst_30 = arith.constant 3.200000e+01 : f32
    %37 = vector.broadcast %cst_30 : f32 to vector<8x1xf32>
    %38 = arith.divf %36, %37 : vector<8x1xf32>
    %cst_31 = arith.constant 9.99999974E-6 : f32
    %39 = vector.broadcast %cst_31 : f32 to vector<8x1xf32>
    %40 = arith.addf %38, %39 : vector<8x1xf32>
    %41 = math.rsqrt %40 : vector<8x1xf32>
    %42 = vector.broadcast %41 : vector<8x1xf32> to vector<8x32xf32>
    %43 = arith.mulf %33, %42 : vector<8x32xf32>
    %c0_32 = arith.constant 0 : index
    %c0_33 = arith.constant 0 : index
    %44 = vector.load %arg7[%c0_32, %c0_33] : memref<1x32xf32, #tpu.memory_space<vmem>>, vector<1x32xf32>
    %45 = vector.broadcast %44 : vector<1x32xf32> to vector<8x32xf32>
    %46 = arith.mulf %43, %45 : vector<8x32xf32>
    %c0_34 = arith.constant 0 : index
    %c0_35 = arith.constant 0 : index
    %47 = vector.load %arg8[%c0_34, %c0_35] : memref<1x32xf32, #tpu.memory_space<vmem>>, vector<1x32xf32>
    %48 = vector.broadcast %47 : vector<1x32xf32> to vector<8x32xf32>
    %49 = arith.addf %46, %48 : vector<8x32xf32>
    %50 = arith.negf %49 : vector<8x32xf32>
    %51 = math.exp %50 : vector<8x32xf32>
    %cst_36 = arith.constant 1.000000e+00 : f32
    %52 = vector.broadcast %cst_36 : f32 to vector<8x32xf32>
    %53 = arith.addf %52, %51 : vector<8x32xf32>
    %54 = arith.divf %52, %53 : vector<8x32xf32>
    %55 = arith.mulf %49, %54 : vector<8x32xf32>
    %56 = tpu.transpose %55, [1, 0] : vector<8x32xf32> -> vector<32x8xf32>
    %c0_37 = arith.constant 0 : index
    %c0_38 = arith.constant 0 : index
    %c0_39 = arith.constant 0 : index
    %57 = vector.load %arg9[%c0_37, %c0_38, %c0_39] : memref<1x32x8xf32, #tpu.memory_space<vmem>>, vector<1x32x8xf32>
    %58 = vector.shape_cast %57 : vector<1x32x8xf32> to vector<32x8xf32>
    %59 = vector.shape_cast %56 : vector<32x8xf32> to vector<1x32x8xf32>
    tpu.vector_store %arg9[%c0_37, %c0_38, %c0_39], %59 {strides = array<i32>} : memref<1x32x8xf32, #tpu.memory_space<vmem>>, vector<1x32x8xf32>,
    return
  }
  func.func @transform_0(%arg0: i32, %arg1: i32) -> (i32, i32, i32) {
    %c0_i32 = arith.constant 0 : i32
    %c0_i32_0 = arith.constant 0 : i32
    return %arg0, %c0_i32, %arg1 : i32, i32, i32
  }
  func.func @transform_1(%arg0: i32, %arg1: i32) -> (i32, i32, i32, i32) {
    %c0_i32 = arith.constant 0 : i32
    %c0_i32_0 = arith.constant 0 : i32
    %c0_i32_1 = arith.constant 0 : i32
    return %arg0, %arg1, %c0_i32, %c0_i32_0 : i32, i32, i32, i32
  }
  func.func @transform_2(%arg0: i32, %arg1: i32) -> (i32, i32, i32) {
    %c0_i32 = arith.constant 0 : i32
    %c0_i32_0 = arith.constant 0 : i32
    return %arg0, %arg1, %c0_i32 : i32, i32, i32
  }
  func.func @transform_3(%arg0: i32, %arg1: i32) -> (i32, i32, i32) {
    %c0_i32 = arith.constant 0 : i32
    %c0_i32_0 = arith.constant 0 : i32
    %c0_i32_1 = arith.constant 0 : i32
    %c0_i32_2 = arith.constant 0 : i32
    return %c0_i32, %c0_i32_0, %c0_i32_1 : i32, i32, i32
  }
  func.func @transform_4(%arg0: i32, %arg1: i32) -> (i32, i32) {
    %c0_i32 = arith.constant 0 : i32
    %c0_i32_0 = arith.constant 0 : i32
    %c0_i32_1 = arith.constant 0 : i32
    return %c0_i32, %c0_i32_0 : i32, i32
  }
  func.func @transform_5(%arg0: i32, %arg1: i32) -> (i32, i32) {
    %c0_i32 = arith.constant 0 : i32
    %c0_i32_0 = arith.constant 0 : i32
    %c0_i32_1 = arith.constant 0 : i32
    return %c0_i32, %c0_i32_0 : i32, i32
  }
  func.func @transform_6(%arg0: i32, %arg1: i32) -> (i32, i32) {
    %c0_i32 = arith.constant 0 : i32
    %c0_i32_0 = arith.constant 0 : i32
    %c0_i32_1 = arith.constant 0 : i32
    return %c0_i32, %c0_i32_0 : i32, i32
  }
  func.func @transform_7(%arg0: i32, %arg1: i32) -> (i32, i32, i32) {
    %c0_i32 = arith.constant 0 : i32
    %c0_i32_0 = arith.constant 0 : i32
    return %arg0, %c0_i32, %arg1 : i32, i32, i32
  }
}

</mosaic_0001>

<llo_original>
// kernel: tpu_custom_call.1
$region0: #{tpu_custom_call.1}
  #allocation0 [shape = 'u32[]', space=smem, size = 0x4, offset = 0x4, fixed_abs, tag = 'smem constant byte address 0x4 - core index']
  #allocation1 [shape = 'u32[72,128]{1,0:T(1,128)}', space=vmem, size = 0x9000, scoped, tag = 'internal scratch']
  #allocation2 [shape = 'f32[24,32]{1,0:T(8,128)}', space=vmem, size = 0x3000, scoped, tag = 'scratch operand']
  %s0 = inlined_call_operand.vmem [shape: f32[2,32,16], index: 0, kind: input, shape index: {}]
  %s1 = inlined_call_operand.vmem [shape: f32[2,1,1,32], index: 1, kind: input, shape index: {}]
  %s2 = inlined_call_operand.vmem [shape: f32[2,8,1], index: 2, kind: input, shape index: {}]
  %s3 = inlined_call_operand.vmem [shape: f32[3,32,32], index: 3, kind: input, shape index: {}]
  %s4 = inlined_call_operand.vmem [shape: f32[1,32], index: 4, kind: input, shape index: {}]
  %s5 = inlined_call_operand.vmem [shape: f32[1,32], index: 5, kind: input, shape index: {}]
  %s6 = inlined_call_operand.vmem [shape: f32[1,32], index: 6, kind: input, shape index: {}]
  %s7 = inlined_call_operand.vmem [shape: f32[2,32,8], index: 7, kind: output, shape index: {}]
  %s8 = sld [smem:[#allocation0]]
  $region61: #{tpu_custom_call.1} parent=0
    _
  %s10 = ssub.s32 1, %s8
  %s11 = scalar_select 0, %s10, %s8
  loop: start=0, step=1, limit=4
  $region2: #{tpu_custom_call.1} parent=0 // loop_pre_header
    _
  $region3: #{tpu_custom_call.1} parent=0 // loop_header
    %s13 = sphi 0, %s17
    %p14 = scmp.ge.s32.totalorder %s13, 4
    %s20 = sphi 0, %s32
    %s21 = sphi 0, %s28
    %s22 = sphi 0, %s20
    %s23 = sphi 0, %s21
    %s24 = sphi 0, %s22
    %s25 = sphi 0, %s23
    %s37 = sphi 0, %s39
    %s40 = sphi 0, %s37
    %s41 = sphi 0, %s40
    %s57 = sphi 0, %s41
    %s65 = sphi 0, %s67
    %s68 = sphi 0, %s65
    %s69 = sphi 0, %s68
    %s85 = sphi 0, %s69
    %s93 = sphi 0, %s95
    %s96 = sphi 0, %s93
    %s97 = sphi 0, %s96
    %s113 = sphi 0, %s97
    %s117 = sphi 0, %s117
    %s119 = sphi 0, %s117
    %s120 = sphi 0, %s119
    %s134 = sphi 0, %s120
    %s138 = sphi 0, %s138
    %s140 = sphi 0, %s138
    %s141 = sphi 0, %s140
    %s155 = sphi 0, %s141
    %s159 = sphi 0, %s159
    %s161 = sphi 0, %s159
    %s162 = sphi 0, %s161
    %s176 = sphi 0, %s162
    %s180 = sphi 0, %s180
    %s182 = sphi 0, %s180
    %s183 = sphi 0, %s182
    %s197 = sphi 0, %s183
    %s205 = sphi 0, %s207
    %s208 = sphi 0, %s205
    %s209 = sphi 0, %s208
    %s225 = sphi 0, %s209
  $region4: #{tpu_custom_call.1} parent=0 // loop_header_branch
    %16 = sbr.rel (%p14) target = $region8
  $region5: #{tpu_custom_call.1} parent=0 // loop_body
    %s18 = ssub.s32 %s13, 1
    %s19 = ssub.s32 %s13, 2
    %s26 = sadd.s32 1, %s21
    %p27 = scmp.ge.s32.totalorder %s26, 1
    %s28 = scalar_select %p27, 0, %s26
    %s29 = sadd.s32 1, %s20
    %s30 = scalar_select %p27, %s29, %s20
    %p31 = scmp.ge.s32.totalorder %s30, 2
    %s32 = scalar_select %p31, 0, %s30
    %s33 = ssub.s32 %s20, %s32
    %s34 = ssub.s32 %s21, %s28
    %s35 = sor.u32 %s33, %s34
    %p36 = scmp.eq.s32.totalorder %s35, 0
    %s38 = sadd.s32 %s37, 1
    %s39 = scalar_select %p36, %s37, %s38
    %p42 = pneg %p36
    %p43 = scmp.eq.s32.totalorder %s13, 1
    %p44 = por %p42, %p43
    %p45 = scmp.ne.s32.totalorder %s37, %s40
    %p46 = scmp.eq.s32.totalorder %s13, 0
    %p47 = por %p45, %p46
    %p48 = scmp.ne.s32.totalorder %s37, %s40
    %p49 = scmp.eq.s32.totalorder %s18, 1
    %p50 = por %p48, %p49
    %p51 = scmp.ne.s32.totalorder %s40, %s41
    %p52 = scmp.eq.s32.totalorder %s18, 0
    %p53 = por %p51, %p52
    %p54 = scmp.ne.s32.totalorder %s40, %s41
    %p55 = scmp.eq.s32.totalorder %s19, 1
    %p56 = por %p54, %p55
    %p58 = scmp.ne.s32.totalorder %s41, %s57
    %p59 = scmp.eq.s32.totalorder %s19, 0
    %p60 = por %p58, %p59
    %s61 = ssub.s32 %s20, %s32
    %s62 = ssub.s32 %s21, %s28
    %s63 = sor.u32 %s61, %s62
    %p64 = scmp.eq.s32.totalorder %s63, 0
    %s66 = sadd.s32 %s65, 1
    %s67 = scalar_select %p64, %s65, %s66
    %p70 = pneg %p64
    %p71 = scmp.eq.s32.totalorder %s13, 1
    %p72 = por %p70, %p71
    %p73 = scmp.ne.s32.totalorder %s65, %s68
    %p74 = scmp.eq.s32.totalorder %s13, 0
    %p75 = por %p73, %p74
    %p76 = scmp.ne.s32.totalorder %s65, %s68
    %p77 = scmp.eq.s32.totalorder %s18, 1
    %p78 = por %p76, %p77
    %p79 = scmp.ne.s32.totalorder %s68, %s69
    %p80 = scmp.eq.s32.totalorder %s18, 0
    %p81 = por %p79, %p80
    %p82 = scmp.ne.s32.totalorder %s68, %s69
    %p83 = scmp.eq.s32.totalorder %s19, 1
    %p84 = por %p82, %p83
    %p86 = scmp.ne.s32.totalorder %s69, %s85
    %p87 = scmp.eq.s32.totalorder %s19, 0
    %p88 = por %p86, %p87
    %s89 = ssub.s32 %s20, %s32
    %s90 = ssub.s32 %s21, %s28
    %s91 = sor.u32 %s89, %s90
    %p92 = scmp.eq.s32.totalorder %s91, 0
    %s94 = sadd.s32 %s93, 1
    %s95 = scalar_select %p92, %s93, %s94
    %p98 = pneg %p92
    %p99 = scmp.eq.s32.totalorder %s13, 1
    %p100 = por %p98, %p99
    %p101 = scmp.ne.s32.totalorder %s93, %s96
    %p102 = scmp.eq.s32.totalorder %s13, 0
    %p103 = por %p101, %p102
    %p104 = scmp.ne.s32.totalorder %s93, %s96
    %p105 = scmp.eq.s32.totalorder %s18, 1
    %p106 = por %p104, %p105
    %p107 = scmp.ne.s32.totalorder %s96, %s97
    %p108 = scmp.eq.s32.totalorder %s18, 0
    %p109 = por %p107, %p108
    %p110 = scmp.ne.s32.totalorder %s96, %s97
    %p111 = scmp.eq.s32.totalorder %s19, 1
    %p112 = por %p110, %p111
    %p114 = scmp.ne.s32.totalorder %s97, %s113
    %p115 = scmp.eq.s32.totalorder %s19, 0
    %p116 = por %p114, %p115
    %s118 = sadd.s32 %s117, 1
    %p121 = scmp.eq.s32.totalorder %s13, 1
    %p122 = scmp.ne.s32.totalorder %s117, %s119
    %p123 = scmp.eq.s32.totalorder %s13, 0
    %p124 = por %p122, %p123
    %p125 = scmp.ne.s32.totalorder %s117, %s119
    %p126 = scmp.eq.s32.totalorder %s18, 1
    %p127 = por %p125, %p126
    %p128 = scmp.ne.s32.totalorder %s119, %s120
    %p129 = scmp.eq.s32.totalorder %s18, 0
    %p130 = por %p128, %p129
    %p131 = scmp.ne.s32.totalorder %s119, %s120
    %p132 = scmp.eq.s32.totalorder %s19, 1
    %p133 = por %p131, %p132
    %p135 = scmp.ne.s32.totalorder %s120, %s134
    %p136 = scmp.eq.s32.totalorder %s19, 0
    %p137 = por %p135, %p136
    %s139 = sadd.s32 %s138, 1
    %p142 = scmp.eq.s32.totalorder %s13, 1
    %p143 = scmp.ne.s32.totalorder %s138, %s140
    %p144 = scmp.eq.s32.totalorder %s13, 0
    %p145 = por %p143, %p144
    %p146 = scmp.ne.s32.totalorder %s138, %s140
    %p147 = scmp.eq.s32.totalorder %s18, 1
    %p148 = por %p146, %p147
    %p149 = scmp.ne.s32.totalorder %s140, %s141
    %p150 = scmp.eq.s32.totalorder %s18, 0
    %p151 = por %p149, %p150
    %p152 = scmp.ne.s32.totalorder %s140, %s141
    %p153 = scmp.eq.s32.totalorder %s19, 1
    %p154 = por %p152, %p153
    %p156 = scmp.ne.s32.totalorder %s141, %s155
    %p157 = scmp.eq.s32.totalorder %s19, 0
    %p158 = por %p156, %p157
    %s160 = sadd.s32 %s159, 1
    %p163 = scmp.eq.s32.totalorder %s13, 1
    %p164 = scmp.ne.s32.totalorder %s159, %s161
    %p165 = scmp.eq.s32.totalorder %s13, 0
    %p166 = por %p164, %p165
    %p167 = scmp.ne.s32.totalorder %s159, %s161
    %p168 = scmp.eq.s32.totalorder %s18, 1
    %p169 = por %p167, %p168
    %p170 = scmp.ne.s32.totalorder %s161, %s162
    %p171 = scmp.eq.s32.totalorder %s18, 0
    %p172 = por %p170, %p171
    %p173 = scmp.ne.s32.totalorder %s161, %s162
    %p174 = scmp.eq.s32.totalorder %s19, 1
    %p175 = por %p173, %p174
    %p177 = scmp.ne.s32.totalorder %s162, %s176
    %p178 = scmp.eq.s32.totalorder %s19, 0
    %p179 = por %p177, %p178
    %s181 = sadd.s32 %s180, 1
    %p184 = scmp.eq.s32.totalorder %s13, 1
    %p185 = scmp.ne.s32.totalorder %s180, %s182
    %p186 = scmp.eq.s32.totalorder %s13, 0
    %p187 = por %p185, %p186
    %p188 = scmp.ne.s32.totalorder %s180, %s182
    %p189 = scmp.eq.s32.totalorder %s18, 1
    %p190 = por %p188, %p189
    %p191 = scmp.ne.s32.totalorder %s182, %s183
    %p192 = scmp.eq.s32.totalorder %s18, 0
    %p193 = por %p191, %p192
    %p194 = scmp.ne.s32.totalorder %s182, %s183
    %p195 = scmp.eq.s32.totalorder %s19, 1
    %p196 = por %p194, %p195
    %p198 = scmp.ne.s32.totalorder %s183, %s197
    %p199 = scmp.eq.s32.totalorder %s19, 0
    %p200 = por %p198, %p199
    %s201 = ssub.s32 %s20, %s32
    %s202 = ssub.s32 %s21, %s28
    %s203 = sor.u32 %s201, %s202
    %p204 = scmp.eq.s32.totalorder %s203, 0
    %s206 = sadd.s32 %s205, 1
    %s207 = scalar_select %p204, %s205, %s206
    %p210 = pneg %p204
    %p211 = scmp.eq.s32.totalorder %s13, 1
    %p212 = por %p210, %p211
    %p213 = scmp.ne.s32.totalorder %s205, %s208
    %p214 = scmp.eq.s32.totalorder %s13, 0
    %p215 = por %p213, %p214
    %p216 = scmp.ne.s32.totalorder %s205, %s208
    %p217 = scmp.eq.s32.totalorder %s18, 1
    %p218 = por %p216, %p217
    %p219 = scmp.ne.s32.totalorder %s208, %s209
    %p220 = scmp.eq.s32.totalorder %s18, 0
    %p221 = por %p219, %p220
    %p222 = scmp.ne.s32.totalorder %s208, %s209
    %p223 = scmp.eq.s32.totalorder %s19, 1
    %p224 = por %p222, %p223
    %p226 = scmp.ne.s32.totalorder %s209, %s225
    %p227 = scmp.eq.s32.totalorder %s19, 0
    %p228 = por %p226, %p227
    %p229 = scmp.le.s32.totalorder 1, %s13
    %p230 = scmp.lt.s32.totalorder %s13, 3
    %p231 = pnand %p229, %p230
    %p232 = pneg %p231
    // Predicated region
    $region9: #{tpu_custom_call.1} parent=5 // pred_check
      _
    $region10: #{tpu_custom_call.1} parent=5 // pred_check_branch
      %234 = sbr.rel (%p231) target = $region12
    $region11: #{tpu_custom_call.1} parent=5 // pred_region
      %s235 = ssub.s32 %s13, 1
      // Predicated region
      $region13: #{tpu_custom_call.1} parent=11 // pred_check
        %p236 = pneg %p130
      $region14: #{tpu_custom_call.1} parent=11 // pred_check_branch
        %238 = sbr.rel (%p236) target = $region16
      $region15: #{tpu_custom_call.1} parent=11 // pred_region
        _
      $region16: #{tpu_custom_call.1} parent=11 // pred_fallthru
        _
      // Predicated region
      $region17: #{tpu_custom_call.1} parent=11 // pred_check
        %p239 = pneg %p151
      $region18: #{tpu_custom_call.1} parent=11 // pred_check_branch
        %241 = sbr.rel (%p239) target = $region20
      $region19: #{tpu_custom_call.1} parent=11 // pred_region
        _
      $region20: #{tpu_custom_call.1} parent=11 // pred_fallthru
        _
      // Predicated region
      $region21: #{tpu_custom_call.1} parent=11 // pred_check
        %p242 = pneg %p172
      $region22: #{tpu_custom_call.1} parent=11 // pred_check_branch
        %244 = sbr.rel (%p242) target = $region24
      $region23: #{tpu_custom_call.1} parent=11 // pred_region
        _
      $region24: #{tpu_custom_call.1} parent=11 // pred_fallthru
        _
      // Predicated region
      $region25: #{tpu_custom_call.1} parent=11 // pred_check
        %p245 = pneg %p193
      $region26: #{tpu_custom_call.1} parent=11 // pred_check_branch
        %247 = sbr.rel (%p245) target = $region28
      $region27: #{tpu_custom_call.1} parent=11 // pred_region
        _
      $region28: #{tpu_custom_call.1} parent=11 // pred_fallthru
        _
    $region12: #{tpu_custom_call.1} parent=5 // pred_fallthru
      _
    %p248 = scmp.lt.s32.totalorder %s13, 2
    // Predicated region
    $region29: #{tpu_custom_call.1} parent=5 // pred_check
      %p249 = pneg %p248
    $region30: #{tpu_custom_call.1} parent=5 // pred_check_branch
      %251 = sbr.rel (%p249) target = $region32
    $region31: #{tpu_custom_call.1} parent=5 // pred_region
      // Predicated region
      $region33: #{tpu_custom_call.1} parent=31 // pred_check
        %p252 = pneg %p47
      $region34: #{tpu_custom_call.1} parent=31 // pred_check_branch
        %254 = sbr.rel (%p252) target = $region36
      $region35: #{tpu_custom_call.1} parent=31 // pred_region
        %p255 = scmp.lt.s32.totalorder %s20, 1
        %s256 = scalar_select %p255, %s20, 1
        %p257 = scmp.lt.s32.totalorder %s21, 0
        %s258 = scalar_select %p257, %s21, 0
        %s259 = smul.addr %s256, 4
        %s260 = sadd.s32 %s258, %s259
        %s261 = smul.addr %s260, 8
        %s262 = scalar_lea.vmem %s0, %s261
      $region36: #{tpu_custom_call.1} parent=31 // pred_fallthru
        _
      // Predicated region
      $region37: #{tpu_custom_call.1} parent=31 // pred_check
        %p263 = pneg %p75
      $region38: #{tpu_custom_call.1} parent=31 // pred_check_branch
        %265 = sbr.rel (%p263) target = $region40
      $region39: #{tpu_custom_call.1} parent=31 // pred_region
        %p266 = scmp.lt.s32.totalorder %s20, 1
        %s267 = scalar_select %p266, %s20, 1
        %p268 = scmp.lt.s32.totalorder %s21, 0
        %s269 = scalar_select %p268, %s21, 0
        %s270 = sadd.s32 %s269, %s267
        %s271 = scalar_lea.vmem %s1, %s270
      $region40: #{tpu_custom_call.1} parent=31 // pred_fallthru
        _
      // Predicated region
      $region41: #{tpu_custom_call.1} parent=31 // pred_check
        %p272 = pneg %p103
      $region42: #{tpu_custom_call.1} parent=31 // pred_check_branch
        %274 = sbr.rel (%p272) target = $region44
      $region43: #{tpu_custom_call.1} parent=31 // pred_region
        %p275 = scmp.lt.s32.totalorder %s20, 1
        %s276 = scalar_select %p275, %s20, 1
        %p277 = scmp.lt.s32.totalorder %s21, 0
        %s278 = scalar_select %p277, %s21, 0
        %s279 = sadd.s32 %s278, %s276
        %s280 = smul.addr %s279, 8
        %s281 = scalar_lea.vmem %s2, %s280
      $region44: #{tpu_custom_call.1} parent=31 // pred_fallthru
        _
    $region32: #{tpu_custom_call.1} parent=5 // pred_fallthru
      _
    %p282 = scmp.le.s32.totalorder 1, %s13
    %p283 = scmp.lt.s32.totalorder %s13, 3
    %p284 = pnand %p282, %p283
    %p285 = pneg %p284
    // Predicated region
    $region45: #{tpu_custom_call.1} parent=5 // pred_check
      _
    $region46: #{tpu_custom_call.1} parent=5 // pred_check_branch
      %287 = sbr.rel (%p284) target = $region48
    $region47: #{tpu_custom_call.1} parent=5 // pred_region
      %s288 = ssub.s32 %s13, 1
      %p289 = scmp.lt.s32.totalorder %s22, 1
      %s290 = scalar_select %p289, %s22, 1
      %p291 = scmp.lt.s32.totalorder %s23, 0
      %s292 = scalar_select %p291, %s23, 0
      %s293 = smul.addr %s290, 4
      %s294 = sadd.s32 %s292, %s293
      %s295 = smul.addr %s294, 8
      %s296 = scalar_lea.vmem %s0, %s295
      %p297 = pneg %p53
      %p298 = pneg %p50
      %p299 = scmp.lt.s32.totalorder %s22, 1
      %s300 = scalar_select %p299, %s22, 1
      %p301 = scmp.lt.s32.totalorder %s23, 0
      %s302 = scalar_select %p301, %s23, 0
      %s303 = sadd.s32 %s302, %s300
      %s304 = scalar_lea.vmem %s1, %s303
      %p305 = pneg %p81
      %p306 = pneg %p78
      %p307 = scmp.lt.s32.totalorder %s22, 1
      %s308 = scalar_select %p307, %s22, 1
      %p309 = scmp.lt.s32.totalorder %s23, 0
      %s310 = scalar_select %p309, %s23, 0
      %s311 = sadd.s32 %s310, %s308
      %s312 = smul.addr %s311, 8
      %s313 = scalar_lea.vmem %s2, %s312
      %p314 = pneg %p109
      %p315 = pneg %p106
      %p316 = pneg %p130
      %p317 = pneg %p127
      %p318 = pneg %p151
      %p319 = pneg %p148
      %p320 = pneg %p172
      %p321 = pneg %p169
      %p322 = pneg %p193
      %p323 = pneg %p190
      %p324 = pneg %p221
      %p325 = pneg %p218
      %p326 = scmp.lt.s32.totalorder %s22, 1
      %s327 = scalar_select %p326, %s22, 1
      %p328 = scmp.lt.s32.totalorder %s23, 0
      %s329 = scalar_select %p328, %s23, 0
      %s330 = smul.addr %s327, 4
      %s331 = sadd.s32 %s329, %s330
      %s332 = smul.addr %s331, 8
      %s333 = scalar_lea.vmem %s7, %s332
      %p334 = scmp.lt.s32.totalorder %s22, 1
      %s335 = scalar_select %p334, %s22, 1
      %p336 = scmp.lt.s32.totalorder %s23, 0
      %s337 = scalar_select %p336, %s23, 0
      %s338 = smul.addr %s335, 4
      %s339 = sadd.s32 %s337, %s338
      %s340 = smul.addr %s339, 8
      %s341 = scalar_lea.vmem %s0, %s340
      %p342 = scmp.lt.s32.totalorder %s22, 1
      %s343 = scalar_select %p342, %s22, 1
      %p344 = scmp.lt.s32.totalorder %s23, 0
      %s345 = scalar_select %p344, %s23, 0
      %s346 = sadd.s32 %s345, %s343
      %s347 = scalar_lea.vmem %s1, %s346
      %p348 = scmp.lt.s32.totalorder %s22, 1
      %s349 = scalar_select %p348, %s22, 1
      %p350 = scmp.lt.s32.totalorder %s23, 0
      %s351 = scalar_select %p350, %s23, 0
      %s352 = sadd.s32 %s351, %s349
      %s353 = smul.addr %s352, 8
      %s354 = scalar_lea.vmem %s2, %s353
      %p355 = scmp.lt.s32.totalorder %s22, 1
      %s356 = scalar_select %p355, %s22, 1
      %p357 = scmp.lt.s32.totalorder %s23, 0
      %s358 = scalar_select %p357, %s23, 0
      %s359 = smul.addr %s356, 4
      %s360 = sadd.s32 %s358, %s359
      %s361 = smul.addr %s360, 8
      %s362 = scalar_lea.vmem %s7, %s361
      %v363 = vld [vmem:[%s347] sm:$0x1]
      %vm364 = vcmask 253952
      %365 = vst.msk [vmem:[#allocation2 + $0x7] sm:$0x1] %vm364, %v363
      %v366 = vld [vmem:[%s341] sm:$0xff]
      %v367 = vld [vmem:[%s341 + $0x8] sm:$0xff]
      %v368 = vld [vmem:[%s341 + $0x10] sm:$0xff]
      %v369 = vld [vmem:[%s341 + $0x18] sm:$0xff]
      %370 = vxpose.xlu0.b32.start [1/16] %v366, 128
      %371 = vxpose.xlu0.b32.cont [2/16] %v367, 128
      %372 = vxpose.xlu0.b32.cont [3/16] %v368, 128
      %373 = vxpose.xlu0.b32.cont [4/16] %v369, 128
      %374 = vxpose.xlu0.b32.cont [5/16] 0.0, 128
      %375 = vxpose.xlu0.b32.cont [6/16] 0.0, 128
      %376 = vxpose.xlu0.b32.cont [7/16] 0.0, 128
      %377 = vxpose.xlu0.b32.cont [8/16] 0.0, 128
      %378 = vxpose.xlu0.b32.cont [9/16] 0.0, 128
      %379 = vxpose.xlu0.b32.cont [10/16] 0.0, 128
      %380 = vxpose.xlu0.b32.cont [11/16] 0.0, 128
      %381 = vxpose.xlu0.b32.cont [12/16] 0.0, 128
      %382 = vxpose.xlu0.b32.cont [13/16] 0.0, 128
      %383 = vxpose.xlu0.b32.cont [14/16] 0.0, 128
      %384 = vxpose.xlu0.b32.cont [15/16] 0.0, 128
      %385 = vxpose.xlu0.b32.end [16/16] 0.0, 128
      %v386 = vpop.trf.xlu0
      %v387 = vpop.trf.xlu0
      %v388 = vpop.trf.xlu0
      %v389 = vpop.trf.xlu0
      %v390 = vpop.trf.xlu0
      %v391 = vpop.trf.xlu0
      %v392 = vpop.trf.xlu0
      %v393 = vpop.trf.xlu0
      %v394 = vpop.trf.xlu0
      %v395 = vpop.trf.xlu0
      %v396 = vpop.trf.xlu0
      %v397 = vpop.trf.xlu0
      %v398 = vpop.trf.xlu0
      %v399 = vpop.trf.xlu0
      %v400 = vpop.trf.xlu0
      %v401 = vpop.trf.xlu0
      %vm402 = vcmask 261120
      %403 = vst.msk [vmem:[#allocation2 + $0x8] sm:$0xff] %vm402, %v386
      %404 = vst.msk [vmem:[#allocation2 + $0x10] sm:$0xff] %vm402, %v387
      %s405 = scalar_lea.vmem [#allocation2], 7
      %v406 = vld [vmem:[%s405] ss:$2 sm:$0xff]
      %s407 = scalar_lea.vmem [#allocation2], 8
      %v408 = vld [vmem:[%s407] ss:$2 sm:$0xff]
      %s409 = scalar_lea.vmem [#allocation2], 9
      %v410 = vld [vmem:[%s409] ss:$2 sm:$0xff]
      %v411 = vld [vmem:[%s3] sm:$0xff]
      %v412 = vld [vmem:[%s3 + $0x8] sm:$0xff]
      %v413 = vld [vmem:[%s3 + $0x10] sm:$0xff]
      %v414 = vld [vmem:[%s3 + $0x18] sm:$0xff]
      %s415 = scalar_lea.vmem %s3, 32
      %v416 = vld [vmem:[%s415] sm:$0xff]
      %v417 = vld [vmem:[%s415 + $0x8] sm:$0xff]
      %v418 = vld [vmem:[%s415 + $0x10] sm:$0xff]
      %v419 = vld [vmem:[%s415 + $0x18] sm:$0xff]
      %v421 = vsel %vm402, %v408, 0
      %423 = vmatpush.msra.mxu0 0.0
      %424 = vmatpush.msra.mxu0 0.0
      %425 = vmatpush.msra.mxu0 0.0
      %426 = vmatpush.msra.mxu0 0.0
      %427 = vmatpush.msra.mxu0 0.0
      %428 = vmatpush.msra.mxu0 0.0
      %429 = vmatpush.msra.mxu0 0.0
      %430 = vmatpush.msra.mxu0 0.0
      %431 = vmatpush.msra.mxu0 0.0
      %432 = vmatpush.msra.mxu0 0.0
      %433 = vmatpush.msra.mxu0 0.0
      %434 = vmatpush.msra.mxu0 0.0
      %435 = vmatpush.msra.mxu0 %v419
      %436 = vmatpush.msra.mxu0 %v418
      %437 = vmatpush.msra.mxu0 %v417
      %438 = vmatpush.msra.mxu0 %v416
      %439 = vmatmul.f32.gmra.mxu0 %v421
      %v440 = vpop.f32.mrf.mxu0
      %v441 = vadd.f32 0.0, %v440
      %442 = vdwg.mxu0
      %v444 = vsel %vm402, %v406, 0
      %446 = vmatpush.msra.mxu0 0.0
      %447 = vmatpush.msra.mxu0 0.0
      %448 = vmatpush.msra.mxu0 0.0
      %449 = vmatpush.msra.mxu0 0.0
      %450 = vmatpush.msra.mxu0 0.0
      %451 = vmatpush.msra.mxu0 0.0
      %452 = vmatpush.msra.mxu0 0.0
      %453 = vmatpush.msra.mxu0 0.0
      %454 = vmatpush.msra.mxu0 0.0
      %455 = vmatpush.msra.mxu0 0.0
      %456 = vmatpush.msra.mxu0 0.0
      %457 = vmatpush.msra.mxu0 0.0
      %458 = vmatpush.msra.mxu0 %v414
      %459 = vmatpush.msra.mxu0 %v413
      %460 = vmatpush.msra.mxu0 %v412
      %461 = vmatpush.msra.mxu0 %v411
      %462 = vmatmul.f32.gmra.mxu0 %v444
      %v463 = vpop.f32.mrf.mxu0
      %v464 = vadd.f32 %v441, %v463
      %465 = vdwg.mxu0
      %s466 = scalar_lea.vmem %s3, 64
      %v467 = vld [vmem:[%s466] sm:$0xff]
      %v468 = vld [vmem:[%s466 + $0x8] sm:$0xff]
      %v469 = vld [vmem:[%s466 + $0x10] sm:$0xff]
      %v470 = vld [vmem:[%s466 + $0x18] sm:$0xff]
      %v472 = vsel %vm402, %v410, 0
      %474 = vmatpush.msra.mxu0 0.0
      %475 = vmatpush.msra.mxu0 0.0
      %476 = vmatpush.msra.mxu0 0.0
      %477 = vmatpush.msra.mxu0 0.0
      %478 = vmatpush.msra.mxu0 0.0
      %479 = vmatpush.msra.mxu0 0.0
      %480 = vmatpush.msra.mxu0 0.0
      %481 = vmatpush.msra.mxu0 0.0
      %482 = vmatpush.msra.mxu0 0.0
      %483 = vmatpush.msra.mxu0 0.0
      %484 = vmatpush.msra.mxu0 0.0
      %485 = vmatpush.msra.mxu0 0.0
      %486 = vmatpush.msra.mxu0 %v470
      %487 = vmatpush.msra.mxu0 %v469
      %488 = vmatpush.msra.mxu0 %v468
      %489 = vmatpush.msra.mxu0 %v467
      %490 = vmatmul.f32.gmra.mxu0 %v472
      %v491 = vpop.f32.mrf.mxu0
      %v492 = vadd.f32 0.0, %v491
      %493 = vdwg.mxu0
      %v494 = vadd.f32 %v464, %v492
      %v495 = vld [vmem:[%s4] sm:$0x1]
      %v497 = vperm.slane %v495, 0
      %v499 = vadd.f32 %v494, %v497
      %v500 = vld [vmem:[%s354] sm:$0xff]
      %502 = vset.pattern.permute.xlu0 0
      %503 = vperm.xlu0 %502, %v500
      %v504 = vpop.permute.xlu0 %503
      %v506 = vmul.f32 %v499, %v504
      %v507 = vsel %vm402, %v506, 0.0
      %508 = vadd.xlane.f32.xlu0 %v507
      %v509 = vpop.xlane.xlu0 %508
      %v510 = vrcp.pop 32.0
      %v511 = vmul.f32 32.0, %v510
      %v512 = vsub.f32 1.0, %v511
      %v513 = vmul.f32 %v510, %v512
      %v514 = vadd.f32 %v510, %v513
      %vm515 = vweird.f32 %v510
      %v516 = vsel %vm515, %v510, %v514
      %v517 = vmul.f32 %v509, %v516
      %v518 = vsub.f32 %v506, %v517
      %v519 = vmul.f32 %v518, %v518
      %v520 = vsel %vm402, %v519, 0.0
      %521 = vadd.xlane.f32.xlu0 %v520
      %v522 = vpop.xlane.xlu0 %521
      %v523 = vmul.f32 %v522, %v516
      %v524 = vadd.f32 %v523, 1e-05
      %v525 = vrsqrt.pop %v524
      %v526 = vmul.f32 %v525, %v524
      %v527 = vmul.f32 %v526, %v525
      %v528 = vmul.f32 0.5, %v527
      %v529 = vsub.f32 1.5, %v528
      %v530 = vmul.f32 %v525, %v529
      %vm531 = vweird.f32 %v524
      %vm532 = vweird.f32 %v525
      %vm533 = vmor %vm531, %vm532
      %v534 = vsel %vm533, %v525, %v530
      %v535 = vmul.f32 %v518, %v534
      %v536 = vld [vmem:[%s5] sm:$0x1]
      %v538 = vperm.slane %v536, 0
      %v540 = vmul.f32 %v535, %v538
      %v541 = vld [vmem:[%s6] sm:$0x1]
      %v543 = vperm.slane %v541, 0
      %v545 = vadd.f32 %v540, %v543
      %v546 = vxor.u32 %v545, 2147483648
      %v547 = vmul.f32 %v546, 1.442695
      %v548 = vpow.pop %v547
      %v549 = vadd.f32 %v548, 1.0
      %v550 = vrcp.pop %v549
      %v551 = vmul.f32 %v549, %v550
      %v552 = vsub.f32 1.0, %v551
      %v553 = vmul.f32 %v550, %v552
      %v554 = vadd.f32 %v550, %v553
      %vm555 = vweird.f32 %v549
      %vm556 = vweird.f32 %v550
      %vm557 = vmor %vm555, %vm556
      %v558 = vsel %vm557, %v550, %v554
      %v559 = vand.u32 2147483647, %v549
      %vm560 = vcmp.eq.f32.partialorder %v559, 8.507059e+37
      %v561 = vand.u32 %v549, 2147483648
      %v562 = vor.u32 1.1754944e-38, %v561
      %v563 = vsel %vm560, %v562, %v558
      %v564 = vmul.f32 1.0, %v563
      %v565 = vmul.f32 %v545, %v564
      %566 = vxpose.xlu0.b32.start [1/16] %v565, 128
      %567 = vxpose.xlu0.b32.cont [2/16] 0.0, 128
      %568 = vxpose.xlu0.b32.cont [3/16] 0.0, 128
      %569 = vxpose.xlu0.b32.cont [4/16] 0.0, 128
      %570 = vxpose.xlu0.b32.cont [5/16] 0.0, 128
      %571 = vxpose.xlu0.b32.cont [6/16] 0.0, 128
      %572 = vxpose.xlu0.b32.cont [7/16] 0.0, 128
      %573 = vxpose.xlu0.b32.cont [8/16] 0.0, 128
      %574 = vxpose.xlu0.b32.cont [9/16] 0.0, 128
      %575 = vxpose.xlu0.b32.cont [10/16] 0.0, 128
      %576 = vxpose.xlu0.b32.cont [11/16] 0.0, 128
      %577 = vxpose.xlu0.b32.cont [12/16] 0.0, 128
      %578 = vxpose.xlu0.b32.cont [13/16] 0.0, 128
      %579 = vxpose.xlu0.b32.cont [14/16] 0.0, 128
      %580 = vxpose.xlu0.b32.cont [15/16] 0.0, 128
      %581 = vxpose.xlu0.b32.end [16/16] 0.0, 128
      %v582 = vpop.trf.xlu0
      %v583 = vpop.trf.xlu0
      %v584 = vpop.trf.xlu0
      %v585 = vpop.trf.xlu0
      %v586 = vpop.trf.xlu0
      %v587 = vpop.trf.xlu0
      %v588 = vpop.trf.xlu0
      %v589 = vpop.trf.xlu0
      %v590 = vpop.trf.xlu0
      %v591 = vpop.trf.xlu0
      %v592 = vpop.trf.xlu0
      %v593 = vpop.trf.xlu0
      %v594 = vpop.trf.xlu0
      %v595 = vpop.trf.xlu0
      %v596 = vpop.trf.xlu0
      %v597 = vpop.trf.xlu0
      %vm598 = vcmask 64512
      %599 = vst.msk [vmem:[%s362] sm:$0xff] %vm598, %v582
      %600 = vst.msk [vmem:[%s362 + $0x8] sm:$0xff] %vm598, %v583
      %601 = vst.msk [vmem:[%s362 + $0x10] sm:$0xff] %vm598, %v584
      %602 = vst.msk [vmem:[%s362 + $0x18] sm:$0xff] %vm598, %v585
      %p603 = scmp.lt.s32.totalorder %s22, 1
      %s604 = scalar_select %p603, %s22, 1
      %p605 = scmp.lt.s32.totalorder %s23, 0
      %s606 = scalar_select %p605, %s23, 0
      %s607 = smul.addr %s604, 4
      %s608 = sadd.s32 %s606, %s607
      %s609 = smul.addr %s608, 8
      %s610 = scalar_lea.vmem %s7, %s609
      // Predicated region
      $region49: #{tpu_custom_call.1} parent=47 // pred_check
        %p611 = pneg %p218
      $region50: #{tpu_custom_call.1} parent=47 // pred_check_branch
        %613 = sbr.rel (%p611) target = $region52
      $region51: #{tpu_custom_call.1} parent=47 // pred_region
        _
      $region52: #{tpu_custom_call.1} parent=47 // pred_fallthru
        _
    $region48: #{tpu_custom_call.1} parent=5 // pred_fallthru
      _
    %p614 = scmp.le.s32.totalorder 2, %s13
    // Predicated region
    $region53: #{tpu_custom_call.1} parent=5 // pred_check
      %p615 = pneg %p614
    $region54: #{tpu_custom_call.1} parent=5 // pred_check_branch
      %617 = sbr.rel (%p615) target = $region56
    $region55: #{tpu_custom_call.1} parent=5 // pred_region
      %s618 = ssub.s32 %s13, 2
      // Predicated region
      $region57: #{tpu_custom_call.1} parent=55 // pred_check
        %p619 = pneg %p224
      $region58: #{tpu_custom_call.1} parent=55 // pred_check_branch
        %621 = sbr.rel (%p619) target = $region60
      $region59: #{tpu_custom_call.1} parent=55 // pred_region
        %p622 = scmp.lt.s32.totalorder %s24, 1
        %s623 = scalar_select %p622, %s24, 1
        %p624 = scmp.lt.s32.totalorder %s25, 0
        %s625 = scalar_select %p624, %s25, 0
        %s626 = smul.addr %s623, 4
        %s627 = sadd.s32 %s625, %s626
        %s628 = smul.addr %s627, 8
        %s629 = scalar_lea.vmem %s7, %s628
      $region60: #{tpu_custom_call.1} parent=55 // pred_fallthru
        _
    $region56: #{tpu_custom_call.1} parent=5 // pred_fallthru
      _
  $region6: #{tpu_custom_call.1} parent=0 // loop_footer
    %s17 = sadd.s32 1, %s13
  $region7: #{tpu_custom_call.1} parent=0 // loop_footer_branch
    %12 = sbr.rel target = $region3
  $region8: #{tpu_custom_call.1} parent=0 // loop_exit
    _

</llo_original>
